<compile_context>
chip_gen: v6e
topology: v6e:2x2x1
jax: 0.10.0
libtpu: 0.0.40
codegen_flags: <defaults>
</compile_context>

<pallas_src>
import math

import jax
import jax.numpy as jnp
from jax.experimental import pallas as pl
from jax.experimental.pallas import tpu as pltpu


def _head_kernel(x_ref, w_ref, b_ref, cls_ref, ctr_ref, off_ref, sz_ref):
    # x_ref:   (1, C, TN)   features for one (batch, point-tile), channels-major
    # w_ref:   (OUT, C)     all four heads' 1x1-conv weights stacked along OUT
    # b_ref:   (OUT, 1)     biases, broadcast along the lane (point) axis
    # outputs: (1, o, TN)   per-head slabs; TN sits on lanes -> unmasked stores
    x = x_ref[0]                                                    # (C, TN)
    acc = jnp.dot(w_ref[...], x, preferred_element_type=jnp.float32)
    acc = acc + b_ref[...]                                          # (OUT, TN)

    c0 = cls_ref.shape[1]                                           # num classes
    cls_ref[0] = acc[:c0].astype(cls_ref.dtype)
    ctr_ref[0] = acc[c0:c0 + 1].astype(ctr_ref.dtype)
    off_ref[0] = acc[c0 + 1:c0 + 4].astype(off_ref.dtype)
    sz_ref[0] = acc[c0 + 4:c0 + 7].astype(sz_ref.dtype)


def fcaf3d_head(features_bcn, w_all, b_all, num_pred_classes, *, max_tn=8192):
    """features_bcn: [B, C, N] (PyTorch layout). w_all: [OUT, C], b_all: [OUT].

    Returns (cls_preds [B,nc,N], ctr_preds [B,1,N],
             center_offset_preds [B,3,N], size_log_preds [B,3,N]).
    """
    B, C, N = features_bcn.shape
    OUT = w_all.shape[0]
    assert OUT == num_pred_classes + 7

    # Lane-aligned point tile (multiple of 128), capped by a 128-rounded max_tn.
    tn_cap = max(128, (max_tn // 128) * 128)
    tn = max(128, min(tn_cap, pl.cdiv(N, 128) * 128))
    n_tiles = pl.cdiv(N, tn)

    # v7x has 2 TensorCores sharing HBM: make sure there are >= 2 parallel grid
    # units so one core is never idle (negligible cost on v5e/v6e).
    if B * n_tiles < 2 and N > 128:
        tn = max(128, min(tn_cap, pl.cdiv(pl.cdiv(N, 2), 128) * 128))
        n_tiles = pl.cdiv(N, tn)

    out_dtype = features_bcn.dtype
    bias_col = b_all.reshape(OUT, 1)

    # No padding / no trailing slices: the final point tile is a partial block.
    # OOB columns are read as garbage but never written back; every point column
    # is independent (pure per-column matmul), so the valid region is exact.
    out_shapes = (
        jax.ShapeDtypeStruct((B, num_pred_classes, N), out_dtype),
        jax.ShapeDtypeStruct((B, 1, N), out_dtype),
        jax.ShapeDtypeStruct((B, 3, N), out_dtype),
        jax.ShapeDtypeStruct((B, 3, N), out_dtype),
    )
    out_specs = [
        pl.BlockSpec((1, num_pred_classes, tn), lambda b, n: (b, 0, n)),
        pl.BlockSpec((1, 1, tn), lambda b, n: (b, 0, n)),
        pl.BlockSpec((1, 3, tn), lambda b, n: (b, 0, n)),
        pl.BlockSpec((1, 3, tn), lambda b, n: (b, 0, n)),
    ]

    cls_p, ctr_p, off_p, sz_p = pl.pallas_call(
        _head_kernel,
        out_shape=out_shapes,
        grid_spec=pltpu.PrefetchScalarGridSpec(
            num_scalar_prefetch=0,
            # Batch axis first: with B matching the core count it shards 1:1
            # across v7x's two TensorCores; both axes are independent.
            grid=(B, n_tiles),
            in_specs=[
                pl.BlockSpec((1, C, tn), lambda b, n: (b, 0, n)),
                pl.BlockSpec((OUT, C), lambda b, n: (0, 0)),
                pl.BlockSpec((OUT, 1), lambda b, n: (0, 0)),
            ],
            out_specs=out_specs,
        ),
        compiler_params=pltpu.CompilerParams(
            dimension_semantics=("parallel", "parallel"),
        ),
    )(features_bcn, w_all, bias_col)

    return cls_p, ctr_p, off_p, sz_p


def make_params(key, in_channels, num_pred_classes):
    """Deterministic synthetic parameters matching the PyTorch module shapes.

    Conv1d weights are (out, in, 1) in PyTorch; stored here as (out, in), i.e.
    already in the (OUT, C) layout the kernel consumes.
    """
    k_cls, k_ctr, k_off, k_sz, k_ctr_b = jax.random.split(key, 5)
    scale = 1.0 / math.sqrt(in_channels)

    w_cls = jax.random.uniform(k_cls, (num_pred_classes, in_channels),
                               minval=-scale, maxval=scale, dtype=jnp.float32)
    w_ctr = jax.random.uniform(k_ctr, (1, in_channels),
                               minval=-scale, maxval=scale, dtype=jnp.float32)
    w_off = jax.random.uniform(k_off, (3, in_channels),
                               minval=-scale, maxval=scale, dtype=jnp.float32)
    w_sz = jax.random.uniform(k_sz, (3, in_channels),
                              minval=-scale, maxval=scale, dtype=jnp.float32)

    # Bias init per _initialize_biases():
    cls_bias_value = -math.log((1.0 - 0.01) / 0.01)
    b_cls = jnp.full((num_pred_classes,), cls_bias_value, dtype=jnp.float32)
    # conv_ctr bias keeps PyTorch's default uniform init -> deterministic random.
    b_ctr = jax.random.uniform(k_ctr_b, (1,), minval=-scale, maxval=scale,
                               dtype=jnp.float32)
    b_off = jnp.zeros((3,), dtype=jnp.float32)
    b_sz = jnp.full((3,), -2.3, dtype=jnp.float32)

    w_all = jnp.concatenate([w_cls, w_ctr, w_off, w_sz], axis=0)   # (OUT, C)
    b_all = jnp.concatenate([b_cls, b_ctr, b_off, b_sz], axis=0)   # (OUT,)
    return w_all, b_all


def _reference(features, w_all, b_all, num_pred_classes):
    ref = jnp.einsum("oc,bcn->bon", w_all.astype(jnp.float32),
                     features.astype(jnp.float32)) + b_all[None, :, None]
    ref = ref.astype(features.dtype)
    c0 = num_pred_classes
    return ref[:, :c0, :], ref[:, c0:c0 + 1, :], ref[:, c0 + 1:c0 + 4, :], \
        ref[:, c0 + 4:c0 + 7, :]


if __name__ == "__main__":
    B, C, N = 2, 32, 256
    num_pred_classes = 10

    key = jax.random.PRNGKey(0)
    k_feat, k_param = jax.random.split(key)
    features = jax.random.normal(k_feat, (B, C, N), dtype=jnp.float32)
    w_all, b_all = make_params(k_param, C, num_pred_classes)

    outs = fcaf3d_head(features, w_all, b_all, num_pred_classes)
    jax.block_until_ready(outs)
    cls_p, ctr_p, off_p, sz_p = outs

    assert cls_p.shape == (B, num_pred_classes, N)
    assert ctr_p.shape == (B, 1, N)
    assert off_p.shape == (B, 3, N)
    assert sz_p.shape == (B, 3, N)

    refs = _reference(features, w_all, b_all, num_pred_classes)
    for got, ref in zip(outs, refs):
        assert jnp.allclose(got, ref, atol=1e-5, rtol=1e-5)

    # Ragged N (not a multiple of 128) exercises the partial-last-block path.
    N2 = 200
    features2 = jax.random.normal(jax.random.PRNGKey(1), (B, C, N2),
                                  dtype=jnp.float32)
    outs2 = fcaf3d_head(features2, w_all, b_all, num_pred_classes)
    jax.block_until_ready(outs2)
    refs2 = _reference(features2, w_all, b_all, num_pred_classes)
    for got, ref in zip(outs2, refs2):
        assert got.shape == ref.shape
        assert jnp.allclose(got, ref, atol=1e-5, rtol=1e-5)

    # B=1 with large-ish N exercises the two-TensorCore work split.
    N3 = 1024
    features3 = jax.random.normal(jax.random.PRNGKey(2), (1, C, N3),
                                  dtype=jnp.float32)
    outs3 = fcaf3d_head(features3, w_all, b_all, num_pred_classes)
    jax.block_until_ready(outs3)
    refs3 = _reference(features3, w_all, b_all, num_pred_classes)
    for got, ref in zip(outs3, refs3):
        assert got.shape == ref.shape
        assert jnp.allclose(got, ref, atol=1e-5, rtol=1e-5)

    print("KERNEL_OK")
</pallas_src>

<mosaic_0001>
module attributes {stable_mosaic.version = 11 : i64} {
  func.func @_head_kernel(%arg0: i32, %arg1: i32, %arg2: memref<1x32x256xf32, #tpu.memory_space<vmem>>, %arg3: memref<17x32xf32, #tpu.memory_space<vmem>>, %arg4: memref<17x1xf32, #tpu.memory_space<vmem>>, %arg5: memref<1x10x256xf32, #tpu.memory_space<vmem>>, %arg6: memref<1x1x256xf32, #tpu.memory_space<vmem>>, %arg7: memref<1x3x256xf32, #tpu.memory_space<vmem>>, %arg8: memref<1x3x256xf32, #tpu.memory_space<vmem>>) attributes {dimension_semantics = [#tpu.dimension_semantics<parallel>, #tpu.dimension_semantics<parallel>], iteration_bounds = array<i64: 2, 1>, scalar_prefetch = 0 : i64, scratch_operands = 0 : i64, tpu.core_type = #tpu.core_type<tc>, window_params = [{transform_indices = @transform_0, window_bounds = array<i64: 1, 32, 256>}, {pipeline_mode = #tpu.pipeline_mode<synchronous>, transform_indices = @transform_1, window_bounds = array<i64: 17, 32>}, {pipeline_mode = #tpu.pipeline_mode<synchronous>, transform_indices = @transform_2, window_bounds = array<i64: 17, 1>}, {transform_indices = @transform_3, window_bounds = array<i64: 1, 10, 256>}, {transform_indices = @transform_4, window_bounds = array<i64: 1, 1, 256>}, {transform_indices = @transform_5, window_bounds = array<i64: 1, 3, 256>}, {transform_indices = @transform_6, window_bounds = array<i64: 1, 3, 256>}]} {
    %c0 = arith.constant 0 : index
    %c0_0 = arith.constant 0 : index
    %c0_1 = arith.constant 0 : index
    %0 = vector.load %arg2[%c0, %c0_0, %c0_1] : memref<1x32x256xf32, #tpu.memory_space<vmem>>, vector<1x32x256xf32>
    %1 = vector.shape_cast %0 : vector<1x32x256xf32> to vector<32x256xf32>
    %c0_2 = arith.constant 0 : index
    %c0_3 = arith.constant 0 : index
    %2 = vector.load %arg3[%c0_2, %c0_3] : memref<17x32xf32, #tpu.memory_space<vmem>>, vector<17x32xf32>
    %cst = arith.constant dense<0.000000e+00> : vector<17x256xf32>
    %3 = tpu.matmul %2, %1, %cst {dimension_numbers = #tpu.dot_dimension_numbers<[1], [0], [0], [1], [0, 0, 1, 1], [], []>} : vector<17x32xf32>, vector<32x256xf32>, vector<17x256xf32> -> vector<17x256xf32>
    %c0_4 = arith.constant 0 : index
    %c0_5 = arith.constant 0 : index
    %4 = vector.load %arg4[%c0_4, %c0_5] : memref<17x1xf32, #tpu.memory_space<vmem>>, vector<17x1xf32>
    %5 = vector.broadcast %4 : vector<17x1xf32> to vector<17x256xf32>
    %6 = arith.addf %3, %5 : vector<17x256xf32>
    %7 = vector.extract_strided_slice %6 {offsets = [0, 0], sizes = [10, 256], strides = [1, 1]} : vector<17x256xf32> to vector<10x256xf32>
    %c0_6 = arith.constant 0 : index
    %c0_7 = arith.constant 0 : index
    %c0_8 = arith.constant 0 : index
    %8 = vector.load %arg5[%c0_6, %c0_7, %c0_8] : memref<1x10x256xf32, #tpu.memory_space<vmem>>, vector<1x10x256xf32>
    %9 = vector.shape_cast %8 : vector<1x10x256xf32> to vector<10x256xf32>
    %10 = vector.shape_cast %7 : vector<10x256xf32> to vector<1x10x256xf32>
    tpu.vector_store %arg5[%c0_6, %c0_7, %c0_8], %10 {strides = array<i32>} : memref<1x10x256xf32, #tpu.memory_space<vmem>>, vector<1x10x256xf32>,
    %11 = vector.extract_strided_slice %6 {offsets = [10, 0], sizes = [1, 256], strides = [1, 1]} : vector<17x256xf32> to vector<1x256xf32>
    %c0_9 = arith.constant 0 : index
    %c0_10 = arith.constant 0 : index
    %c0_11 = arith.constant 0 : index
    %12 = vector.load %arg6[%c0_9, %c0_10, %c0_11] : memref<1x1x256xf32, #tpu.memory_space<vmem>>, vector<1x1x256xf32>
    %13 = vector.shape_cast %12 : vector<1x1x256xf32> to vector<1x256xf32>
    %14 = vector.shape_cast %11 : vector<1x256xf32> to vector<1x1x256xf32>
    tpu.vector_store %arg6[%c0_9, %c0_10, %c0_11], %14 {strides = array<i32>} : memref<1x1x256xf32, #tpu.memory_space<vmem>>, vector<1x1x256xf32>,
    %15 = vector.extract_strided_slice %6 {offsets = [11, 0], sizes = [3, 256], strides = [1, 1]} : vector<17x256xf32> to vector<3x256xf32>
    %c0_12 = arith.constant 0 : index
    %c0_13 = arith.constant 0 : index
    %c0_14 = arith.constant 0 : index
    %16 = vector.load %arg7[%c0_12, %c0_13, %c0_14] : memref<1x3x256xf32, #tpu.memory_space<vmem>>, vector<1x3x256xf32>
    %17 = vector.shape_cast %16 : vector<1x3x256xf32> to vector<3x256xf32>
    %18 = vector.shape_cast %15 : vector<3x256xf32> to vector<1x3x256xf32>
    tpu.vector_store %arg7[%c0_12, %c0_13, %c0_14], %18 {strides = array<i32>} : memref<1x3x256xf32, #tpu.memory_space<vmem>>, vector<1x3x256xf32>,
    %19 = vector.extract_strided_slice %6 {offsets = [14, 0], sizes = [3, 256], strides = [1, 1]} : vector<17x256xf32> to vector<3x256xf32>
    %c0_15 = arith.constant 0 : index
    %c0_16 = arith.constant 0 : index
    %c0_17 = arith.constant 0 : index
    %20 = vector.load %arg8[%c0_15, %c0_16, %c0_17] : memref<1x3x256xf32, #tpu.memory_space<vmem>>, vector<1x3x256xf32>
    %21 = vector.shape_cast %20 : vector<1x3x256xf32> to vector<3x256xf32>
    %22 = vector.shape_cast %19 : vector<3x256xf32> to vector<1x3x256xf32>
    tpu.vector_store %arg8[%c0_15, %c0_16, %c0_17], %22 {strides = array<i32>} : memref<1x3x256xf32, #tpu.memory_space<vmem>>, vector<1x3x256xf32>,
    return
  }
  func.func @transform_0(%arg0: i32, %arg1: i32) -> (i32, i32, i32) {
    %c0_i32 = arith.constant 0 : i32
    %c0_i32_0 = arith.constant 0 : i32
    return %arg0, %c0_i32, %arg1 : i32, i32, i32
  }
  func.func @transform_1(%arg0: i32, %arg1: i32) -> (i32, i32) {
    %c0_i32 = arith.constant 0 : i32
    %c0_i32_0 = arith.constant 0 : i32
    %c0_i32_1 = arith.constant 0 : i32
    return %c0_i32, %c0_i32_0 : i32, i32
  }
  func.func @transform_2(%arg0: i32, %arg1: i32) -> (i32, i32) {
    %c0_i32 = arith.constant 0 : i32
    %c0_i32_0 = arith.constant 0 : i32
    %c0_i32_1 = arith.constant 0 : i32
    return %c0_i32, %c0_i32_0 : i32, i32
  }
  func.func @transform_3(%arg0: i32, %arg1: i32) -> (i32, i32, i32) {
    %c0_i32 = arith.constant 0 : i32
    %c0_i32_0 = arith.constant 0 : i32
    return %arg0, %c0_i32, %arg1 : i32, i32, i32
  }
  func.func @transform_4(%arg0: i32, %arg1: i32) -> (i32, i32, i32) {
    %c0_i32 = arith.constant 0 : i32
    %c0_i32_0 = arith.constant 0 : i32
    return %arg0, %c0_i32, %arg1 : i32, i32, i32
  }
  func.func @transform_5(%arg0: i32, %arg1: i32) -> (i32, i32, i32) {
    %c0_i32 = arith.constant 0 : i32
    %c0_i32_0 = arith.constant 0 : i32
    return %arg0, %c0_i32, %arg1 : i32, i32, i32
  }
  func.func @transform_6(%arg0: i32, %arg1: i32) -> (i32, i32, i32) {
    %c0_i32 = arith.constant 0 : i32
    %c0_i32_0 = arith.constant 0 : i32
    return %arg0, %c0_i32, %arg1 : i32, i32, i32
  }
}

</mosaic_0001>

<llo_original>
// kernel: tpu_custom_call.1
$region0: #{tpu_custom_call.1}
  #allocation0 [shape = 'u32[]', space=smem, size = 0x4, offset = 0x4, fixed_abs, tag = 'smem constant byte address 0x4 - core index']
  #allocation1 [shape = 'u32[144,128]{1,0:T(1,128)}', space=vmem, size = 0x12000, scoped, tag = 'internal scratch']
  %s0 = inlined_call_operand.hbm [shape: f32[2,32,256], index: 0, kind: input, shape index: {}]
  %s1 = inlined_call_operand.vmem [shape: f32[17,32], index: 1, kind: input, shape index: {}]
  %s2 = inlined_call_operand.vmem [shape: f32[17,1], index: 2, kind: input, shape index: {}]
  %s3 = inlined_call_operand.vmem [shape: f32[2,10,256], index: 3, kind: output, shape index: {0}]
  %s4 = inlined_call_operand.hbm [shape: f32[2,1,256], index: 4, kind: output, shape index: {1}]
  %s5 = inlined_call_operand.vmem [shape: f32[2,3,256], index: 5, kind: output, shape index: {2}]
  %s6 = inlined_call_operand.vmem [shape: f32[2,3,256], index: 6, kind: output, shape index: {3}]
  %7 = xla_tuple %s3, %s4, %s5, %s6
  %s8 = sld [smem:[#allocation0]]
  $region73: #{tpu_custom_call.1} parent=0
    _
  %s10 = ssub.s32 1, %s8
  %s11 = scalar_select 0, %s10, %s8
  $region1: #{tpu_custom_call.1} parent=0
    #allocation2 [shape = 'u8[65536]{0}', space=vmem, size = 0x10000, scoped, tag = 'input window, operand 0']
    #allocation3 [shape = 's32[2]{0}', space=sflag, size = 0x8, scoped, tag = 'scoped memory for tpu_custom_call.1']
    #allocation4 [shape = 's32[2]{0}', space=sflag, size = 0x8, scoped, tag = 'scoped memory for tpu_custom_call.1']
    #allocation5 [shape = 'u8[2048]{0}', space=vmem, size = 0x800, scoped, tag = 'output window, operand 1']
    %12 = vsyncpa [#allocation3], 0
    %s13 = scalar_lea.sflag [#allocation3], 1
    %14 = vsyncpa %s13, 0
    %15 = vsyncpa [#allocation4], 0
    %s16 = scalar_lea.sflag [#allocation4], 1
    %17 = vsyncpa %s16, 0
    loop: start=0, step=1, limit=4
    $region2: #{tpu_custom_call.1} parent=1 // loop_pre_header
      _
    $region3: #{tpu_custom_call.1} parent=1 // loop_header
      %s19 = sphi 0, %s23
      %p20 = scmp.ge.s32.totalorder %s19, 4
      %s26 = sphi 0, %s38
      %s27 = sphi 0, %s34
      %s28 = sphi 0, %s26
      %s29 = sphi 0, %s27
      %s30 = sphi 0, %s28
      %s31 = sphi 0, %s29
      %s43 = sphi 0, %s45
      %s46 = sphi 0, %s43
      %s47 = sphi 0, %s46
      %s63 = sphi 0, %s47
      %s67 = sphi 0, %s67
      %s69 = sphi 0, %s67
      %s70 = sphi 0, %s69
      %s84 = sphi 0, %s70
      %s88 = sphi 0, %s88
      %s90 = sphi 0, %s88
      %s91 = sphi 0, %s90
      %s105 = sphi 0, %s91
      %s113 = sphi 0, %s115
      %s116 = sphi 0, %s113
      %s117 = sphi 0, %s116
      %s133 = sphi 0, %s117
      %s141 = sphi 0, %s143
      %s144 = sphi 0, %s141
      %s145 = sphi 0, %s144
      %s161 = sphi 0, %s145
      %s169 = sphi 0, %s171
      %s172 = sphi 0, %s169
      %s173 = sphi 0, %s172
      %s189 = sphi 0, %s173
      %s197 = sphi 0, %s199
      %s200 = sphi 0, %s197
      %s201 = sphi 0, %s200
      %s217 = sphi 0, %s201
    $region4: #{tpu_custom_call.1} parent=1 // loop_header_branch
      %22 = sbr.rel (%p20) target = $region8
    $region5: #{tpu_custom_call.1} parent=1 // loop_body
      %s24 = ssub.s32 %s19, 1
      %s25 = ssub.s32 %s19, 2
      %s32 = sadd.s32 1, %s27
      %p33 = scmp.ge.s32.totalorder %s32, 1
      %s34 = scalar_select %p33, 0, %s32
      %s35 = sadd.s32 1, %s26
      %s36 = scalar_select %p33, %s35, %s26
      %p37 = scmp.ge.s32.totalorder %s36, 2
      %s38 = scalar_select %p37, 0, %s36
      %s39 = ssub.s32 %s26, %s38
      %s40 = ssub.s32 %s27, %s34
      %s41 = sor.u32 %s39, %s40
      %p42 = scmp.eq.s32.totalorder %s41, 0
      %s44 = sadd.s32 %s43, 1
      %s45 = scalar_select %p42, %s43, %s44
      %p48 = pneg %p42
      %p49 = scmp.eq.s32.totalorder %s19, 1
      %p50 = por %p48, %p49
      %p51 = scmp.ne.s32.totalorder %s43, %s46
      %p52 = scmp.eq.s32.totalorder %s19, 0
      %p53 = por %p51, %p52
      %p54 = scmp.ne.s32.totalorder %s43, %s46
      %p55 = scmp.eq.s32.totalorder %s24, 1
      %p56 = por %p54, %p55
      %p57 = scmp.ne.s32.totalorder %s46, %s47
      %p58 = scmp.eq.s32.totalorder %s24, 0
      %p59 = por %p57, %p58
      %p60 = scmp.ne.s32.totalorder %s46, %s47
      %p61 = scmp.eq.s32.totalorder %s25, 1
      %p62 = por %p60, %p61
      %p64 = scmp.ne.s32.totalorder %s47, %s63
      %p65 = scmp.eq.s32.totalorder %s25, 0
      %p66 = por %p64, %p65
      %s68 = sadd.s32 %s67, 1
      %p71 = scmp.eq.s32.totalorder %s19, 1
      %p72 = scmp.ne.s32.totalorder %s67, %s69
      %p73 = scmp.eq.s32.totalorder %s19, 0
      %p74 = por %p72, %p73
      %p75 = scmp.ne.s32.totalorder %s67, %s69
      %p76 = scmp.eq.s32.totalorder %s24, 1
      %p77 = por %p75, %p76
      %p78 = scmp.ne.s32.totalorder %s69, %s70
      %p79 = scmp.eq.s32.totalorder %s24, 0
      %p80 = por %p78, %p79
      %p81 = scmp.ne.s32.totalorder %s69, %s70
      %p82 = scmp.eq.s32.totalorder %s25, 1
      %p83 = por %p81, %p82
      %p85 = scmp.ne.s32.totalorder %s70, %s84
      %p86 = scmp.eq.s32.totalorder %s25, 0
      %p87 = por %p85, %p86
      %s89 = sadd.s32 %s88, 1
      %p92 = scmp.eq.s32.totalorder %s19, 1
      %p93 = scmp.ne.s32.totalorder %s88, %s90
      %p94 = scmp.eq.s32.totalorder %s19, 0
      %p95 = por %p93, %p94
      %p96 = scmp.ne.s32.totalorder %s88, %s90
      %p97 = scmp.eq.s32.totalorder %s24, 1
      %p98 = por %p96, %p97
      %p99 = scmp.ne.s32.totalorder %s90, %s91
      %p100 = scmp.eq.s32.totalorder %s24, 0
      %p101 = por %p99, %p100
      %p102 = scmp.ne.s32.totalorder %s90, %s91
      %p103 = scmp.eq.s32.totalorder %s25, 1
      %p104 = por %p102, %p103
      %p106 = scmp.ne.s32.totalorder %s91, %s105
      %p107 = scmp.eq.s32.totalorder %s25, 0
      %p108 = por %p106, %p107
      %s109 = ssub.s32 %s26, %s38
      %s110 = ssub.s32 %s27, %s34
      %s111 = sor.u32 %s109, %s110
      %p112 = scmp.eq.s32.totalorder %s111, 0
      %s114 = sadd.s32 %s113, 1
      %s115 = scalar_select %p112, %s113, %s114
      %p118 = pneg %p112
      %p119 = scmp.eq.s32.totalorder %s19, 1
      %p120 = por %p118, %p119
      %p121 = scmp.ne.s32.totalorder %s113, %s116
      %p122 = scmp.eq.s32.totalorder %s19, 0
      %p123 = por %p121, %p122
      %p124 = scmp.ne.s32.totalorder %s113, %s116
      %p125 = scmp.eq.s32.totalorder %s24, 1
      %p126 = por %p124, %p125
      %p127 = scmp.ne.s32.totalorder %s116, %s117
      %p128 = scmp.eq.s32.totalorder %s24, 0
      %p129 = por %p127, %p128
      %p130 = scmp.ne.s32.totalorder %s116, %s117
      %p131 = scmp.eq.s32.totalorder %s25, 1
      %p132 = por %p130, %p131
      %p134 = scmp.ne.s32.totalorder %s117, %s133
      %p135 = scmp.eq.s32.totalorder %s25, 0
      %p136 = por %p134, %p135
      %s137 = ssub.s32 %s26, %s38
      %s138 = ssub.s32 %s27, %s34
      %s139 = sor.u32 %s137, %s138
      %p140 = scmp.eq.s32.totalorder %s139, 0
      %s142 = sadd.s32 %s141, 1
      %s143 = scalar_select %p140, %s141, %s142
      %p146 = pneg %p140
      %p147 = scmp.eq.s32.totalorder %s19, 1
      %p148 = por %p146, %p147
      %p149 = scmp.ne.s32.totalorder %s141, %s144
      %p150 = scmp.eq.s32.totalorder %s19, 0
      %p151 = por %p149, %p150
      %p152 = scmp.ne.s32.totalorder %s141, %s144
      %p153 = scmp.eq.s32.totalorder %s24, 1
      %p154 = por %p152, %p153
      %p155 = scmp.ne.s32.totalorder %s144, %s145
      %p156 = scmp.eq.s32.totalorder %s24, 0
      %p157 = por %p155, %p156
      %p158 = scmp.ne.s32.totalorder %s144, %s145
      %p159 = scmp.eq.s32.totalorder %s25, 1
      %p160 = por %p158, %p159
      %p162 = scmp.ne.s32.totalorder %s145, %s161
      %p163 = scmp.eq.s32.totalorder %s25, 0
      %p164 = por %p162, %p163
      %s165 = ssub.s32 %s26, %s38
      %s166 = ssub.s32 %s27, %s34
      %s167 = sor.u32 %s165, %s166
      %p168 = scmp.eq.s32.totalorder %s167, 0
      %s170 = sadd.s32 %s169, 1
      %s171 = scalar_select %p168, %s169, %s170
      %p174 = pneg %p168
      %p175 = scmp.eq.s32.totalorder %s19, 1
      %p176 = por %p174, %p175
      %p177 = scmp.ne.s32.totalorder %s169, %s172
      %p178 = scmp.eq.s32.totalorder %s19, 0
      %p179 = por %p177, %p178
      %p180 = scmp.ne.s32.totalorder %s169, %s172
      %p181 = scmp.eq.s32.totalorder %s24, 1
      %p182 = por %p180, %p181
      %p183 = scmp.ne.s32.totalorder %s172, %s173
      %p184 = scmp.eq.s32.totalorder %s24, 0
      %p185 = por %p183, %p184
      %p186 = scmp.ne.s32.totalorder %s172, %s173
      %p187 = scmp.eq.s32.totalorder %s25, 1
      %p188 = por %p186, %p187
      %p190 = scmp.ne.s32.totalorder %s173, %s189
      %p191 = scmp.eq.s32.totalorder %s25, 0
      %p192 = por %p190, %p191
      %s193 = ssub.s32 %s26, %s38
      %s194 = ssub.s32 %s27, %s34
      %s195 = sor.u32 %s193, %s194
      %p196 = scmp.eq.s32.totalorder %s195, 0
      %s198 = sadd.s32 %s197, 1
      %s199 = scalar_select %p196, %s197, %s198
      %p202 = pneg %p196
      %p203 = scmp.eq.s32.totalorder %s19, 1
      %p204 = por %p202, %p203
      %p205 = scmp.ne.s32.totalorder %s197, %s200
      %p206 = scmp.eq.s32.totalorder %s19, 0
      %p207 = por %p205, %p206
      %p208 = scmp.ne.s32.totalorder %s197, %s200
      %p209 = scmp.eq.s32.totalorder %s24, 1
      %p210 = por %p208, %p209
      %p211 = scmp.ne.s32.totalorder %s200, %s201
      %p212 = scmp.eq.s32.totalorder %s24, 0
      %p213 = por %p211, %p212
      %p214 = scmp.ne.s32.totalorder %s200, %s201
      %p215 = scmp.eq.s32.totalorder %s25, 1
      %p216 = por %p214, %p215
      %p218 = scmp.ne.s32.totalorder %s201, %s217
      %p219 = scmp.eq.s32.totalorder %s25, 0
      %p220 = por %p218, %p219
      %p221 = scmp.le.s32.totalorder 1, %s19
      %p222 = scmp.lt.s32.totalorder %s19, 3
      %p223 = pnand %p221, %p222
      %p224 = pneg %p223
      // Predicated region
      $region9: #{tpu_custom_call.1} parent=5 // pred_check
        _
      $region10: #{tpu_custom_call.1} parent=5 // pred_check_branch
        %226 = sbr.rel (%p223) target = $region12
      $region11: #{tpu_custom_call.1} parent=5 // pred_region
        %s227 = ssub.s32 %s19, 1
        // Predicated region
        $region13: #{tpu_custom_call.1} parent=11 // pred_check
          %p228 = pneg %p80
        $region14: #{tpu_custom_call.1} parent=11 // pred_check_branch
          %230 = sbr.rel (%p228) target = $region16
        $region15: #{tpu_custom_call.1} parent=11 // pred_region
          _
        $region16: #{tpu_custom_call.1} parent=11 // pred_fallthru
          _
        // Predicated region
        $region17: #{tpu_custom_call.1} parent=11 // pred_check
          %p231 = pneg %p101
        $region18: #{tpu_custom_call.1} parent=11 // pred_check_branch
          %233 = sbr.rel (%p231) target = $region20
        $region19: #{tpu_custom_call.1} parent=11 // pred_region
          _
        $region20: #{tpu_custom_call.1} parent=11 // pred_fallthru
          _
      $region12: #{tpu_custom_call.1} parent=5 // pred_fallthru
        _
      %p234 = scmp.lt.s32.totalorder %s19, 2
      // Predicated region
      $region21: #{tpu_custom_call.1} parent=5 // pred_check
        %p235 = pneg %p234
      $region22: #{tpu_custom_call.1} parent=5 // pred_check_branch
        %237 = sbr.rel (%p235) target = $region24
      $region23: #{tpu_custom_call.1} parent=5 // pred_region
        // Predicated region
        $region25: #{tpu_custom_call.1} parent=23 // pred_check
          %p238 = pneg %p53
        $region26: #{tpu_custom_call.1} parent=23 // pred_check_branch
          %240 = sbr.rel (%p238) target = $region28
        $region27: #{tpu_custom_call.1} parent=23 // pred_region
          %s241 = sand.u32 %s43, 1
          %s242 = scalar_lea.sflag [#allocation3], %s241
          %s243 = sand.u32 %s43, 1
          %s244 = smul.addr %s243, 64
          %s245 = scalar_lea.vmem [#allocation2], %s244
          %s246 = smul.u32 2, %s27
          %s248 = ssub.s32 1024, 1024
          %249 = vsyncadd %s242, %s248
          %s250 = smul.addr %s26, 8
          %s251 = sadd.s32 %s246, %s250
          %s252 = smul.addr %s251, 128
          %s253 = scalar_lea.hbm %s0, %s252
          %s254 = sshll.u32 %s245, 4
          %s255 = int_to_ptr.vmem [resolvable:$true] %s254
          %260 = dma.hbm_to_vmem [thread:$0]  %s253, 1024, %s255, %s242, 256, 256, 16
        $region28: #{tpu_custom_call.1} parent=23 // pred_fallthru
          _
      $region24: #{tpu_custom_call.1} parent=5 // pred_fallthru
        _
      %p261 = scmp.le.s32.totalorder 1, %s19
      %p262 = scmp.lt.s32.totalorder %s19, 3
      %p263 = pnand %p261, %p262
      %p264 = pneg %p263
      // Predicated region
      $region29: #{tpu_custom_call.1} parent=5 // pred_check
        _
      $region30: #{tpu_custom_call.1} parent=5 // pred_check_branch
        %266 = sbr.rel (%p263) target = $region32
      $region31: #{tpu_custom_call.1} parent=5 // pred_region
        %s267 = ssub.s32 %s19, 1
        %s268 = sand.u32 %s46, 1
        %s269 = scalar_lea.sflag [#allocation3], %s268
        %s270 = sand.u32 %s46, 1
        %s271 = smul.addr %s270, 64
        %s272 = scalar_lea.vmem [#allocation2], %s271
        // Predicated region
        $region33: #{tpu_custom_call.1} parent=31 // pred_check
          %p273 = pneg %p59
        $region34: #{tpu_custom_call.1} parent=31 // pred_check_branch
          %275 = sbr.rel (%p273) target = $region36
        $region35: #{tpu_custom_call.1} parent=31 // pred_region
          %276 = dma.done %s269, 1024
        $region36: #{tpu_custom_call.1} parent=31 // pred_fallthru
          _
        %s277 = sand.u32 %s46, 1
        %s278 = scalar_lea.sflag [#allocation3], %s277
        %s279 = sand.u32 %s46, 1
        %s280 = smul.addr %s279, 64
        %s281 = scalar_lea.vmem [#allocation2], %s280
        %p282 = pneg %p59
        %p283 = pneg %p56
        %p284 = pneg %p80
        %p285 = pneg %p77
        %p286 = pneg %p101
        %p287 = pneg %p98
        %p288 = pneg %p129
        %p289 = pneg %p126
        %s290 = smul.u32 2, %s29
        %p291 = scmp.lt.s32.totalorder %s28, 1
        %s292 = scalar_select %p291, %s28, 1
        %p293 = scmp.lt.s32.totalorder %s290, 1
        %s294 = scalar_select %p293, %s290, 1
        %s295 = smul.addr %s292, 4
        %s296 = sadd.s32 %s294, %s295
        %s297 = smul.addr %s296, 8
        %s298 = scalar_lea.vmem %s3, %s297
        %p299 = pneg %p157
        %p300 = pneg %p154
        %s301 = sand.u32 %s144, 1
        %s302 = scalar_lea.sflag [#allocation4], %s301
        %s303 = sand.u32 %s144, 1
        %s304 = smul.addr %s303, 2
        %s305 = scalar_lea.vmem [#allocation5], %s304
        %p306 = pneg %p185
        %p307 = pneg %p182
        %s308 = smul.u32 2, %s29
        %p309 = scmp.lt.s32.totalorder %s28, 1
        %s310 = scalar_select %p309, %s28, 1
        %p311 = scmp.lt.s32.totalorder %s308, 1
        %s312 = scalar_select %p311, %s308, 1
        %s313 = smul.addr %s310, 2
        %s314 = sadd.s32 %s312, %s313
        %s315 = smul.addr %s314, 4
        %s316 = scalar_lea.vmem %s5, %s315
        %p317 = pneg %p213
        %p318 = pneg %p210
        %s319 = smul.u32 2, %s29
        %p320 = scmp.lt.s32.totalorder %s28, 1
        %s321 = scalar_select %p320, %s28, 1
        %p322 = scmp.lt.s32.totalorder %s319, 1
        %s323 = scalar_select %p322, %s319, 1
        %s324 = smul.addr %s321, 2
        %s325 = sadd.s32 %s323, %s324
        %s326 = smul.addr %s325, 4
        %s327 = scalar_lea.vmem %s6, %s326
        %s328 = smul.u32 2, %s29
        %s329 = smul.u32 2, %s29
        %p330 = scmp.lt.s32.totalorder %s28, 1
        %s331 = scalar_select %p330, %s28, 1
        %p332 = scmp.lt.s32.totalorder %s329, 1
        %s333 = scalar_select %p332, %s329, 1
        %s334 = smul.addr %s331, 4
        %s335 = sadd.s32 %s333, %s334
        %s336 = smul.addr %s335, 8
        %s337 = scalar_lea.vmem %s3, %s336
        %s338 = smul.u32 2, %s29
        %s339 = smul.u32 2, %s29
        %s340 = smul.u32 2, %s29
        %p341 = scmp.lt.s32.totalorder %s28, 1
        %s342 = scalar_select %p341, %s28, 1
        %p343 = scmp.lt.s32.totalorder %s340, 1
        %s344 = scalar_select %p343, %s340, 1
        %s345 = smul.addr %s342, 2
        %s346 = sadd.s32 %s344, %s345
        %s347 = smul.addr %s346, 4
        %s348 = scalar_lea.vmem %s5, %s347
        %s349 = smul.u32 2, %s29
        %s350 = smul.u32 2, %s29
        %p351 = scmp.lt.s32.totalorder %s28, 1
        %s352 = scalar_select %p351, %s28, 1
        %p353 = scmp.lt.s32.totalorder %s350, 1
        %s354 = scalar_select %p353, %s350, 1
        %s355 = smul.addr %s352, 2
        %s356 = sadd.s32 %s354, %s355
        %s357 = smul.addr %s356, 4
        %s358 = scalar_lea.vmem %s6, %s357
        %s359 = smul.u32 2, %s29
        %v360 = vld [vmem:[%s272] sm:$0xff]
        %v361 = vld [vmem:[%s272 + $0x8] sm:$0xff]
        %v362 = vld [vmem:[%s272 + $0x10] sm:$0xff]
        %v363 = vld [vmem:[%s272 + $0x18] sm:$0xff]
        %v364 = vld [vmem:[%s272 + $0x20] sm:$0xff]
        %v365 = vld [vmem:[%s272 + $0x28] sm:$0xff]
        %v366 = vld [vmem:[%s272 + $0x30] sm:$0xff]
        %v367 = vld [vmem:[%s272 + $0x38] sm:$0xff]
        %v368 = vld [vmem:[%s1] sm:$0xff]
        %v369 = vld [vmem:[%s1 + $0x8] sm:$0xff]
        %v370 = vld [vmem:[%s1 + $0x10] sm:$0x1]
        %v371 = vld [vmem:[%s2] sm:$0xff]
        %v372 = vld [vmem:[%s2 + $0x8] sm:$0xff]
        %v373 = vld [vmem:[%s2 + $0x10] sm:$0x1]
        %375 = vset.pattern.permute.xlu0 0
        %376 = vperm.xlu0 %375, %v371
        %v377 = vpop.permute.xlu0 %376
        %380 = vset.pattern.permute.xlu0 0
        %381 = vperm.xlu0 %380, %v372
        %v382 = vpop.permute.xlu0 %381
        %385 = vset.pattern.permute.xlu0 0
        %386 = vperm.xlu0 %385, %v373
        %v387 = vpop.permute.xlu0 %386
        %vm389 = vcmask 261120
        %v391 = vsel %vm389, %v368, 0
        %v394 = vsel %vm389, %v369, 0
        %v397 = vsel %vm389, %v370, 0
        %399 = vmatprep.subr.mxu0 0.0
        %400 = vmatpush1.msra.mxu0 0.0
        %401 = vmatprep.subr.mxu0 0.0
        %402 = vmatpush1.msra.mxu0 0.0
        %403 = vmatprep.subr.mxu0 0.0
        %404 = vmatpush1.msra.mxu0 0.0
        %405 = vmatprep.subr.mxu0 0.0
        %406 = vmatpush1.msra.mxu0 0.0
        %407 = vmatprep.subr.mxu0 0.0
        %408 = vmatpush1.msra.mxu0 0.0
        %409 = vmatprep.subr.mxu0 0.0
        %410 = vmatpush1.msra.mxu0 0.0
        %411 = vmatprep.subr.mxu0 0.0
        %412 = vmatpush1.msra.mxu0 0.0
        %413 = vmatprep.subr.mxu0 0.0
        %414 = vmatpush1.msra.mxu0 0.0
        %415 = vmatprep.subr.mxu0 0.0
        %416 = vmatpush1.msra.mxu0 0.0
        %417 = vmatprep.subr.mxu0 0.0
        %418 = vmatpush1.msra.mxu0 0.0
        %419 = vmatprep.subr.mxu0 0.0
        %420 = vmatpush1.msra.mxu0 0.0
        %421 = vmatprep.subr.mxu0 0.0
        %422 = vmatpush1.msra.mxu0 0.0
        %423 = vmatprep.subr.mxu0 %v367
        %424 = vmatpush1.msra.mxu0 %v366
        %425 = vmatprep.subr.mxu0 %v365
        %426 = vmatpush1.msra.mxu0 %v364
        %427 = vmatprep.subr.mxu0 %v363
        %428 = vmatpush1.msra.mxu0 %v362
        %429 = vmatprep.subr.mxu0 %v361
        %430 = vmatpush1.msra.mxu0 %v360
        %431 = vmatprep.subr.mxu0 0.0
        %432 = vmatpush2.msra.mxu0 0.0
        %433 = vmatprep.subr.mxu0 0.0
        %434 = vmatpush2.msra.mxu0 0.0
        %435 = vmatprep.subr.mxu0 0.0
        %436 = vmatpush2.msra.mxu0 0.0
        %437 = vmatprep.subr.mxu0 0.0
        %438 = vmatpush2.msra.mxu0 0.0
        %439 = vmatprep.subr.mxu0 0.0
        %440 = vmatpush2.msra.mxu0 0.0
        %441 = vmatprep.subr.mxu0 0.0
        %442 = vmatpush2.msra.mxu0 0.0
        %443 = vmatprep.subr.mxu0 0.0
        %444 = vmatpush2.msra.mxu0 0.0
        %445 = vmatprep.subr.mxu0 0.0
        %446 = vmatpush2.msra.mxu0 0.0
        %447 = vmatprep.subr.mxu0 0.0
        %448 = vmatpush2.msra.mxu0 0.0
        %449 = vmatprep.subr.mxu0 0.0
        %450 = vmatpush2.msra.mxu0 0.0
        %451 = vmatprep.subr.mxu0 0.0
        %452 = vmatpush2.msra.mxu0 0.0
        %453 = vmatprep.subr.mxu0 0.0
        %454 = vmatpush2.msra.mxu0 0.0
        %455 = vmatprep.subr.mxu0 0.0
        %456 = vmatpush2.msra.mxu0 0.0
        %457 = vmatprep.subr.mxu0 0.0
        %458 = vmatpush2.msra.mxu0 0.0
        %459 = vmatprep.subr.mxu0 0.0
        %460 = vmatpush2.msra.mxu0 0.0
        %461 = vmatprep.subr.mxu0 0.0
        %462 = vmatpush2.msra.mxu0 0.0
        %463 = vmatprep.mubr.f32.mxu0 0.0
        %464 = vmatmul.mubr.f32.gmra.mxu0 %v391
        %v465 = vpop.f32.mrf.mxu0
        %v466 = vadd.f32 %v377, %v465
        %v467 = vpop.f32.mrf.mxu0
        %v468 = vadd.f32 %v377, %v467
        %469 = vmatprep.mubr.f32.mxu0 0.0
        %470 = vmatmul.mubr.f32.gmra.mxu0 %v394
        %v471 = vpop.f32.mrf.mxu0
        %v472 = vadd.f32 %v382, %v471
        %v473 = vpop.f32.mrf.mxu0
        %v474 = vadd.f32 %v382, %v473
        %475 = vmatprep.mubr.f32.mxu0 0.0
        %476 = vmatmul.mubr.f32.gmra.mxu0 %v397
        %v477 = vpop.f32.mrf.mxu0
        %v478 = vadd.f32 %v387, %v477
        %v479 = vpop.f32.mrf.mxu0
        %v480 = vadd.f32 %v387, %v479
        %481 = vdwg.mxu0
        %482 = vst [vmem:[%s337] sm:$0xff] %v466
        %483 = vst [vmem:[%s337 + $0x8] sm:$0xff] %v468
        %484 = vst [vmem:[%s337 + $0x10] sm:$0x3] %v472
        %485 = vst [vmem:[%s337 + $0x18] sm:$0x3] %v474
        %v488 = vcombine.low %v472, %v474
        %v490 = vunpack.c.l.s4 1966171168
        %v491 = vunpack.c.0.s8 %v490
        %v492 = vlaneseq
        %v493 = vshrl.u32 %v492, 7
        %v494 = vsub.s32 %v491, %v493
        %v495 = vrot.slane %v488, %v494
        %v497 = vunpack.c.l.s4 1966171168
        %v498 = vunpack.c.0.s8 %v497
        %v499 = vlaneseq
        %v500 = vshrl.u32 %v499, 7
        %v501 = vsub.s32 %v498, %v500
        %v502 = vrot.slane %v495, %v501
        %v503 = vcombine.high %v502, %v502
        %v505 = vlaneseq
        %vm506 = vcmp.ge.s32.totalorder %v505, 0
        %vm507 = vcmp.lt.s32.totalorder %v505, 256
        %vm508 = vmand %vm506, %vm507
        %509 = vst.msk [vmem:[%s305] sm:$0x3] %vm508, %v503
        %v510 = vcombine.high %v472, %v474
        %vm511 = vcmask 1040384
        %vm512 = vcmask 1044484
        %vm513 = vmor %vm511, %vm512
        %v514 = vrot.slane %v488, 7
        %v515 = vrot.slane %v514, 4
        %v516 = vrot.slane %v510, 7
        %v517 = vsel %vm513, %v515, %v516
        %519 = vst [vmem:[%s348] sm:$0x77] %v517
        %v522 = vcombine.low %v478, %v480
        %vm523 = vcmask 1041408
        %vm524 = vcmask 1045508
        %vm525 = vmor %vm523, %vm524
        %v526 = vrot.slane %v510, 6
        %v527 = vrot.slane %v526, 4
        %v528 = vrot.slane %v522, 6
        %v529 = vsel %vm525, %v527, %v528
        %531 = vst [vmem:[%s358] sm:$0x77] %v529
        %s532 = smul.u32 2, %s29
        %p533 = scmp.lt.s32.totalorder %s28, 1
        %s534 = scalar_select %p533, %s28, 1
        %p535 = scmp.lt.s32.totalorder %s532, 1
        %s536 = scalar_select %p535, %s532, 1
        %s537 = smul.addr %s534, 4
        %s538 = sadd.s32 %s536, %s537
        %s539 = smul.addr %s538, 8
        %s540 = scalar_lea.vmem %s3, %s539
        %s541 = sand.u32 %s144, 1
        %s542 = scalar_lea.sflag [#allocation4], %s541
        %s543 = sand.u32 %s144, 1
        %s544 = smul.addr %s543, 2
        %s545 = scalar_lea.vmem [#allocation5], %s544
        %s546 = smul.u32 2, %s29
        %p547 = scmp.lt.s32.totalorder %s28, 1
        %s548 = scalar_select %p547, %s28, 1
        %p549 = scmp.lt.s32.totalorder %s546, 1
        %s550 = scalar_select %p549, %s546, 1
        %s551 = smul.addr %s548, 2
        %s552 = sadd.s32 %s550, %s551
        %s553 = smul.addr %s552, 4
        %s554 = scalar_lea.vmem %s5, %s553
        %s555 = smul.u32 2, %s29
        %p556 = scmp.lt.s32.totalorder %s28, 1
        %s557 = scalar_select %p556, %s28, 1
        %p558 = scmp.lt.s32.totalorder %s555, 1
        %s559 = scalar_select %p558, %s555, 1
        %s560 = smul.addr %s557, 2
        %s561 = sadd.s32 %s559, %s560
        %s562 = smul.addr %s561, 4
        %s563 = scalar_lea.vmem %s6, %s562
        // Predicated region
        $region37: #{tpu_custom_call.1} parent=31 // pred_check
          %p564 = pneg %p126
        $region38: #{tpu_custom_call.1} parent=31 // pred_check_branch
          %566 = sbr.rel (%p564) target = $region40
        $region39: #{tpu_custom_call.1} parent=31 // pred_region
          %s567 = smul.u32 2, %s29
        $region40: #{tpu_custom_call.1} parent=31 // pred_fallthru
          _
        // Predicated region
        $region41: #{tpu_custom_call.1} parent=31 // pred_check
          %p568 = pneg %p154
        $region42: #{tpu_custom_call.1} parent=31 // pred_check_branch
          %570 = sbr.rel (%p568) target = $region44
        $region43: #{tpu_custom_call.1} parent=31 // pred_region
          %s571 = smul.u32 2, %s29
          %s573 = ssub.s32 32, 32
          %574 = vsyncadd %s542, %s573
          %s575 = smul.addr %s28, 2
          %s576 = sadd.s32 %s571, %s575
          %s577 = smul.addr %s576, 16
          %s578 = scalar_lea.hbm %s4, %s577
          %s580 = sshll.u32 %s545, 4
          %s581 = int_to_ptr.vmem [resolvable:$true] %s580
          %583 = dma.vmem_to_hbm [thread:$0]  %s581, 32, %s578, %s542
        $region44: #{tpu_custom_call.1} parent=31 // pred_fallthru
          _
        // Predicated region
        $region45: #{tpu_custom_call.1} parent=31 // pred_check
          %p584 = pneg %p182
        $region46: #{tpu_custom_call.1} parent=31 // pred_check_branch
          %586 = sbr.rel (%p584) target = $region48
        $region47: #{tpu_custom_call.1} parent=31 // pred_region
          %s587 = smul.u32 2, %s29
        $region48: #{tpu_custom_call.1} parent=31 // pred_fallthru
          _
        // Predicated region
        $region49: #{tpu_custom_call.1} parent=31 // pred_check
          %p588 = pneg %p210
        $region50: #{tpu_custom_call.1} parent=31 // pred_check_branch
          %590 = sbr.rel (%p588) target = $region52
        $region51: #{tpu_custom_call.1} parent=31 // pred_region
          %s591 = smul.u32 2, %s29
        $region52: #{tpu_custom_call.1} parent=31 // pred_fallthru
          _
      $region32: #{tpu_custom_call.1} parent=5 // pred_fallthru
        _
      %p592 = scmp.le.s32.totalorder 2, %s19
      // Predicated region
      $region53: #{tpu_custom_call.1} parent=5 // pred_check
        %p593 = pneg %p592
      $region54: #{tpu_custom_call.1} parent=5 // pred_check_branch
        %595 = sbr.rel (%p593) target = $region56
      $region55: #{tpu_custom_call.1} parent=5 // pred_region
        %s596 = ssub.s32 %s19, 2
        // Predicated region
        $region57: #{tpu_custom_call.1} parent=55 // pred_check
          %p597 = pneg %p132
        $region58: #{tpu_custom_call.1} parent=55 // pred_check_branch
          %599 = sbr.rel (%p597) target = $region60
        $region59: #{tpu_custom_call.1} parent=55 // pred_region
          %s600 = smul.u32 2, %s31
          %p601 = scmp.lt.s32.totalorder %s30, 1
          %s602 = scalar_select %p601, %s30, 1
          %p603 = scmp.lt.s32.totalorder %s600, 1
          %s604 = scalar_select %p603, %s600, 1
          %s605 = smul.addr %s602, 4
          %s606 = sadd.s32 %s604, %s605
          %s607 = smul.addr %s606, 8
          %s608 = scalar_lea.vmem %s3, %s607
        $region60: #{tpu_custom_call.1} parent=55 // pred_fallthru
          _
        // Predicated region
        $region61: #{tpu_custom_call.1} parent=55 // pred_check
          %p609 = pneg %p160
        $region62: #{tpu_custom_call.1} parent=55 // pred_check_branch
          %611 = sbr.rel (%p609) target = $region64
        $region63: #{tpu_custom_call.1} parent=55 // pred_region
          %s612 = sand.u32 %s145, 1
          %s613 = scalar_lea.sflag [#allocation4], %s612
          %s614 = sand.u32 %s145, 1
          %s615 = smul.addr %s614, 2
          %s616 = scalar_lea.vmem [#allocation5], %s615
          %617 = dma.done %s613, 32
        $region64: #{tpu_custom_call.1} parent=55 // pred_fallthru
          _
        // Predicated region
        $region65: #{tpu_custom_call.1} parent=55 // pred_check
          %p618 = pneg %p188
        $region66: #{tpu_custom_call.1} parent=55 // pred_check_branch
          %620 = sbr.rel (%p618) target = $region68
        $region67: #{tpu_custom_call.1} parent=55 // pred_region
          %s621 = smul.u32 2, %s31
          %p622 = scmp.lt.s32.totalorder %s30, 1
          %s623 = scalar_select %p622, %s30, 1
          %p624 = scmp.lt.s32.totalorder %s621, 1
          %s625 = scalar_select %p624, %s621, 1
          %s626 = smul.addr %s623, 2
          %s627 = sadd.s32 %s625, %s626
          %s628 = smul.addr %s627, 4
          %s629 = scalar_lea.vmem %s5, %s628
        $region68: #{tpu_custom_call.1} parent=55 // pred_fallthru
          _
        // Predicated region
        $region69: #{tpu_custom_call.1} parent=55 // pred_check
          %p630 = pneg %p216
        $region70: #{tpu_custom_call.1} parent=55 // pred_check_branch
          %632 = sbr.rel (%p630) target = $region72
        $region71: #{tpu_custom_call.1} parent=55 // pred_region
          %s633 = smul.u32 2, %s31
          %p634 = scmp.lt.s32.totalorder %s30, 1
          %s635 = scalar_select %p634, %s30, 1
          %p636 = scmp.lt.s32.totalorder %s633, 1
          %s637 = scalar_select %p636, %s633, 1
          %s638 = smul.addr %s635, 2
          %s639 = sadd.s32 %s637, %s638
          %s640 = smul.addr %s639, 4
          %s641 = scalar_lea.vmem %s6, %s640
        $region72: #{tpu_custom_call.1} parent=55 // pred_fallthru
          _
      $region56: #{tpu_custom_call.1} parent=5 // pred_fallthru
        _
    $region6: #{tpu_custom_call.1} parent=1 // loop_footer
      %s23 = sadd.s32 1, %s19
    $region7: #{tpu_custom_call.1} parent=1 // loop_footer_branch
      %18 = sbr.rel target = $region3
    $region8: #{tpu_custom_call.1} parent=1 // loop_exit
      _
    %642 = vsyncpa [#allocation3], 1
    %s643 = scalar_lea.sflag [#allocation3], 1
    %644 = vsyncpa %s643, 1
    %645 = vsyncpa [#allocation4], 1
    %s646 = scalar_lea.sflag [#allocation4], 1
    %647 = vsyncpa %s646, 1

</llo_original>
